<compile_context>
chip_gen: v7x
topology: tpu7x:2x2x1
jax: 0.10.0
libtpu: 0.0.40
codegen_flags: <defaults>
</compile_context>

<pallas_src>
import functools

import jax
import jax.numpy as jnp
from jax.experimental import pallas as pl
from jax.experimental.pallas import tpu as pltpu

_LANE = 128


def _round_up(x, m):
    return (x + m - 1) // m * m


# -----------------------------------------------------------------------------
# Per-generation policy + capability probe (best effort, safe fallbacks)
# -----------------------------------------------------------------------------
def _tpu_policy():
    """Returns (vmem_capacity_bytes, tensorcores_per_chip, batch_tile_cap)."""
    vmem_cap = 64 << 20                       # conservative default (v7x per-TC VMEM)
    try:
        vmem_cap = int(pltpu.get_tpu_info().vmem_capacity_bytes)
    except Exception:
        pass
    num_tc = 1
    try:
        kind = jax.devices()[0].device_kind.lower()
        # megacore chips (2 TensorCores behind one device): v4, v5p, v7x
        if ("v4" in kind) or ("v5p" in kind) or ("7" in kind):
            num_tc = 2
    except Exception:
        pass
    tile_cap = 1024 if vmem_cap >= (96 << 20) else 512   # bigger tiles on 128 MiB chips
    return vmem_cap, num_tc, tile_cap


@functools.lru_cache(maxsize=None)
def _buffered1_supported():
    """Probe (eagerly, once) whether pipeline_mode=pl.Buffered(1) lowers on this backend;
    if not, grid-invariant weights fall back to default double buffering."""
    def _k(x_ref, o_ref):
        o_ref[...] = x_ref[...] + 1.0
    try:
        fn = pl.pallas_call(
            _k,
            grid=(2,),
            in_specs=[pl.BlockSpec((8, _LANE), lambda i: (0, 0),
                                   pipeline_mode=pl.Buffered(1))],
            out_specs=pl.BlockSpec((8, _LANE), lambda i: (0, 0)),
            out_shape=jax.ShapeDtypeStruct((8, _LANE), jnp.float32),
        )
        jax.block_until_ready(fn(jnp.zeros((8, _LANE), jnp.float32)))
        return True
    except Exception:
        return False


def _invariant_spec(p, single_buffer):
    """Whole-array, grid-invariant BlockSpec for a VMEM-resident weight slab."""
    zeros = (0,) * p.ndim
    if single_buffer:
        return pl.BlockSpec(p.shape, lambda *_: zeros, pipeline_mode=pl.Buffered(1))
    return pl.BlockSpec(p.shape, lambda *_: zeros)


# -----------------------------------------------------------------------------
# Kernels
# -----------------------------------------------------------------------------
def _resident_mlp_kernel(*refs, n_layer: int):
    """Whole MLP fused; all (padded) weights resident in VMEM; activations never hit HBM."""
    if n_layer > 0:
        (x_ref, w_in_ref, b_in_ref, w_hid_ref, b_hid_ref,
         w_out_ref, b_out_ref, o_ref) = refs
    else:
        x_ref, w_in_ref, b_in_ref, o_ref = refs

    # input Linear (no activation in the PyTorch module); f32 accumulation + f32 epilogue
    h = jnp.dot(x_ref[...], w_in_ref[...], preferred_element_type=jnp.float32)
    h = h + b_in_ref[...]

    # hidden blocks: Linear -> ReLU -> Dropout (identity in eval mode) — static unroll
    for i in range(n_layer):
        h = jnp.dot(h.astype(w_hid_ref.dtype), w_hid_ref[i],
                    preferred_element_type=jnp.float32)
        h = jnp.maximum(h + b_hid_ref[i:i + 1, :], 0.0)
        # TODO(synk): training-mode Dropout(0.5) (pltpu.prng_random_bits mask) not implemented.

    if n_layer > 0:
        h = jnp.dot(h.astype(w_out_ref.dtype), w_out_ref[...],
                    preferred_element_type=jnp.float32)
        h = h + b_out_ref[...]

    o_ref[...] = h.astype(o_ref.dtype)          # lane-dense (128-padded) store


def _streaming_mlp_kernel(x_ref, w_in_ref, b_in_ref, w_hid_ref, b_hid_ref,
                          w_out_ref, b_out_ref, o_ref, h_ref):
    """Layer-streaming fallback: grid = (batch_tiles, n_layer). One hidden-layer weight
    tile is DMA'd per grid step (pipeline double-buffers it) and the running activation
    is carried in a VMEM scratch, so VMEM capacity does not bound model size."""
    l = pl.program_id(1)

    @pl.when(l == 0)
    def _():
        h0 = jnp.dot(x_ref[...], w_in_ref[...], preferred_element_type=jnp.float32)
        h_ref[...] = h0 + b_in_ref[...]

    h = jnp.dot(h_ref[...].astype(w_hid_ref.dtype), w_hid_ref[0],
                preferred_element_type=jnp.float32)
    h_ref[...] = jnp.maximum(h + b_hid_ref[0], 0.0)
    # TODO(synk): training-mode Dropout(0.5) not implemented (eval-mode identity).

    @pl.when(l == pl.num_programs(1) - 1)
    def _():
        out = jnp.dot(h_ref[...].astype(w_out_ref.dtype), w_out_ref[...],
                      preferred_element_type=jnp.float32)
        o_ref[...] = (out + b_out_ref[...]).astype(o_ref.dtype)


# -----------------------------------------------------------------------------
# Parameter packing (call once, outside the hot path)
# -----------------------------------------------------------------------------
def pack_mlp_params(params, n_layer, compute_dtype=jnp.bfloat16, lane_pad=_LANE):
    """Pack per-layer (W [in,out], b [out]) into the fused-kernel layout.

    All feature dims (n_input, nh, n_output) are zero-padded to a multiple of lane_pad so
    every matmul is lane/MXU dense; zero rows/cols/bias keep padded lanes exactly 0 through
    the ReLUs. Weights -> compute_dtype (bf16 default: half the VMEM/DMA, f32 accumulation
    in-kernel), biases stay f32. Hidden biases are a 2-D [n_layer, nh_pad] slab.
    Returns (packed_tuple, n_output)."""
    n_output = params[-1][0].shape[1]
    n_out_pad = _round_up(n_output, lane_pad)

    def pad_w(w, rp, cp):
        w = w.astype(compute_dtype)
        return jnp.zeros((rp, cp), compute_dtype).at[:w.shape[0], :w.shape[1]].set(w)

    def pad_b(b, cp):
        b = b.astype(jnp.float32).reshape(-1)
        return jnp.zeros((cp,), jnp.float32).at[:b.shape[0]].set(b)

    if n_layer > 0:
        n_input = params[0][0].shape[0]
        nh = params[0][0].shape[1]
        n_in_pad = _round_up(n_input, lane_pad)
        nh_pad = _round_up(nh, lane_pad)
        w_in = pad_w(params[0][0], n_in_pad, nh_pad)
        b_in = pad_b(params[0][1], nh_pad).reshape(1, nh_pad)
        w_hid = jnp.stack([pad_w(params[1 + i][0], nh_pad, nh_pad)
                           for i in range(n_layer)])
        b_hid = jnp.stack([pad_b(params[1 + i][1], nh_pad)
                           for i in range(n_layer)])          # [n_layer, nh_pad]
        w_out = pad_w(params[-1][0], nh_pad, n_out_pad)
        b_out = pad_b(params[-1][1], n_out_pad).reshape(1, n_out_pad)
        packed = (w_in, b_in, w_hid, b_hid, w_out, b_out)
    else:
        n_input = params[0][0].shape[0]
        n_in_pad = _round_up(n_input, lane_pad)
        w = pad_w(params[0][0], n_in_pad, n_out_pad)
        b = pad_b(params[0][1], n_out_pad).reshape(1, n_out_pad)
        packed = (w, b)
    return packed, n_output


# -----------------------------------------------------------------------------
# Forward
# -----------------------------------------------------------------------------
def mlp_regression_forward(x, packed, *, n_layer, n_output, force_streaming=False):
    """Forward matching MLP_Regression.forward (eval mode). x: [batch, n_input]."""
    return _forward_jit(x, packed, n_layer=n_layer, n_output=n_output,
                        force_streaming=force_streaming,
                        single_buffer_weights=_buffered1_supported())


@functools.partial(jax.jit,
                   static_argnames=("n_layer", "n_output", "force_streaming",
                                    "single_buffer_weights"))
def _forward_jit(x, packed, *, n_layer, n_output, force_streaming,
                 single_buffer_weights):
    out_dtype = x.dtype
    B, n_input = x.shape
    compute_dtype = packed[0].dtype
    itemsize = jnp.dtype(compute_dtype).itemsize
    n_in_pad = packed[0].shape[0]
    nh_pad = packed[0].shape[1]
    n_out_pad = packed[-2].shape[-1]

    vmem_cap, num_tc, tile_cap = _tpu_policy()

    # Batch tile: dtype-native sublane pack, >= num_tc grid steps (v7x megacore), per-gen cap.
    row_align = {4: 8, 2: 16, 1: 32}.get(itemsize, 8)
    tm = min(_round_up(max(pl.cdiv(max(B, 1), num_tc), 1), row_align), tile_cap)
    B_pad = _round_up(max(B, 1), tm)
    grid_b = B_pad // tm

    # Pad batch rows and lane-pad the feature dim (padded weight rows are zero).
    x = jnp.pad(x.astype(compute_dtype), ((0, B_pad - B), (0, n_in_pad - n_input)))

    # --- VMEM budgeting / resident-vs-streaming decision --------------------------------
    param_bytes = sum(int(p.size) * p.dtype.itemsize for p in packed)
    weight_bufs = 1 if single_buffer_weights else 2
    act_bytes = (2 * tm * (n_in_pad + n_out_pad) * itemsize   # double-buffered x / out tiles
                 + tm * nh_pad * 4)                           # f32 hidden activations
    resident_need = weight_bufs * param_bytes + act_bytes + (4 << 20)
    use_streaming = (n_layer > 0) and (force_streaming or resident_need > vmem_cap)

    if use_streaming:
        hid_bytes = n_layer * nh_pad * nh_pad * itemsize
        need = (weight_bufs * (param_bytes - hid_bytes)       # in/out weights + biases resident
                + 2 * nh_pad * nh_pad * itemsize              # double-buffered per-layer W tile
                + act_bytes + (4 << 20))
    else:
        need = resident_need
    vmem_limit = int(min(max(2 * need, 32 << 20), vmem_cap - (2 << 20)))

    # --- cost hint for the XLA scheduler -------------------------------------------------
    if n_layer > 0:
        flops = 2 * B_pad * (n_in_pad * nh_pad + n_layer * nh_pad * nh_pad
                             + nh_pad * n_out_pad)
    else:
        flops = 2 * B_pad * n_in_pad * n_out_pad
    bytes_accessed = (B_pad * n_in_pad * itemsize + param_bytes
                      + B_pad * n_out_pad * jnp.dtype(out_dtype).itemsize)
    cost = pl.CostEstimate(flops=int(flops), transcendentals=0,
                           bytes_accessed=int(bytes_accessed))

    inv = functools.partial(_invariant_spec, single_buffer=single_buffer_weights)

    if use_streaming:
        w_in, b_in, w_hid, b_hid, w_out, b_out = packed
        operands = (x, w_in, b_in, w_hid,
                    b_hid.reshape(n_layer, 1, nh_pad), w_out, b_out)
        grid = (grid_b, n_layer)
        in_specs = [
            pl.BlockSpec((tm, n_in_pad), lambda i, l: (i, 0)),
            inv(w_in), inv(b_in),
            pl.BlockSpec((1, nh_pad, nh_pad), lambda i, l: (l, 0, 0)),   # streamed layer W
            pl.BlockSpec((1, 1, nh_pad), lambda i, l: (l, 0, 0)),        # streamed layer b
            inv(w_out), inv(b_out),
        ]
        out_specs = pl.BlockSpec((tm, n_out_pad), lambda i, l: (i, 0))
        scratch_shapes = [pltpu.VMEM((tm, nh_pad), jnp.float32)]
        dim_sem = ("parallel", "arbitrary")
        kernel = _streaming_mlp_kernel
    else:
        operands = (x,) + tuple(packed)
        grid = (grid_b,)
        in_specs = ([pl.BlockSpec((tm, n_in_pad), lambda i: (i, 0))]
                    + [inv(p) for p in packed])
        out_specs = pl.BlockSpec((tm, n_out_pad), lambda i: (i, 0))
        scratch_shapes = []
        dim_sem = ("parallel",)
        kernel = functools.partial(_resident_mlp_kernel, n_layer=n_layer)

    out = pl.pallas_call(
        kernel,
        grid=grid,
        out_shape=jax.ShapeDtypeStruct((B_pad, n_out_pad), out_dtype),
        in_specs=in_specs,
        out_specs=out_specs,
        scratch_shapes=scratch_shapes,
        compiler_params=pltpu.CompilerParams(
            dimension_semantics=dim_sem,
            vmem_limit_bytes=vmem_limit,
        ),
        cost_estimate=cost,
    )(*operands)

    return out[:B, :n_output]


# -----------------------------------------------------------------------------
# Init (mimics PyTorch nn.Linear default init; W stored [in, out] so y = x @ W + b)
# -----------------------------------------------------------------------------
def init_mlp_params(key, n_input, n_output, n_layer, nh_nodes, dtype=jnp.float32):
    layers = []
    dims = [(n_input, nh_nodes if n_layer > 0 else n_output)]
    if n_layer > 0:
        for _ in range(n_layer):
            dims.append((nh_nodes, nh_nodes))
        dims.append((nh_nodes, n_output))
    for (fan_in, fan_out) in dims:
        key, kw, kb = jax.random.split(key, 3)
        bound = 1.0 / jnp.sqrt(float(fan_in))
        w = jax.random.uniform(kw, (fan_in, fan_out), dtype, -bound, bound)
        b = jax.random.uniform(kb, (fan_out,), dtype, -bound, bound)
        layers.append((w, b))
    return layers


if __name__ == "__main__":
    # small shapes consistent with the module
    batch, n_input, n_output, n_layer, nh_nodes = 8, 16, 4, 2, 32

    key = jax.random.PRNGKey(0)
    key, kx = jax.random.split(key)
    x = jax.random.normal(kx, (batch, n_input), jnp.float32)
    params = init_mlp_params(key, n_input, n_output, n_layer, nh_nodes)

    # pure-JAX reference (eval mode: Dropout = identity)
    ref = x
    w, b = params[0]
    ref = ref @ w + b
    for i in range(1, 1 + n_layer):
        w, b = params[i]
        ref = jnp.maximum(ref @ w + b, 0.0)
    w, b = params[-1]
    ref = ref @ w + b

    # 1) f32 weights (exact check), fully-resident path
    packed_f32, n_out = pack_mlp_params(params, n_layer, compute_dtype=jnp.float32)
    y = mlp_regression_forward(x, packed_f32, n_layer=n_layer, n_output=n_out)
    jax.block_until_ready(y)
    assert y.shape == (batch, n_output), y.shape
    assert jnp.allclose(y, ref, atol=1e-5, rtol=1e-5), float(jnp.max(jnp.abs(y - ref)))

    # 2) layer-streaming fallback path (auto-selected when weights don't fit resident,
    #    e.g. large nh on v7x's 64 MiB VMEM; forced here to exercise it)
    y_s = mlp_regression_forward(x, packed_f32, n_layer=n_layer, n_output=n_out,
                                 force_streaming=True)
    jax.block_until_ready(y_s)
    assert jnp.allclose(y_s, ref, atol=1e-5, rtol=1e-5), float(jnp.max(jnp.abs(y_s - ref)))

    # 3) bf16 weights (default packing; f32 accumulation) — loose check
    packed_bf16, _ = pack_mlp_params(params, n_layer)
    y_b = mlp_regression_forward(x, packed_bf16, n_layer=n_layer, n_output=n_out)
    jax.block_until_ready(y_b)
    assert y_b.shape == (batch, n_output)
    assert jnp.allclose(y_b, ref, atol=1e-1, rtol=1e-1), float(jnp.max(jnp.abs(y_b - ref)))

    print("KERNEL_OK")
</pallas_src>

<mosaic_0001>
module attributes {stable_mosaic.version = 11 : i64} {
  func.func @_k(%arg0: i32, %arg1: memref<8x128xf32, #tpu.memory_space<vmem>>, %arg2: memref<8x128xf32, #tpu.memory_space<vmem>>) attributes {dimension_semantics = [#tpu.dimension_semantics<arbitrary>], iteration_bounds = array<i64: 2>, scalar_prefetch = 0 : i64, scratch_operands = 0 : i64, tpu.core_type = #tpu.core_type<tc>, window_params = [{pipeline_mode = #tpu.pipeline_mode<synchronous>, transform_indices = @transform_0, window_bounds = array<i64: 8, 128>}, {pipeline_mode = #tpu.pipeline_mode<synchronous>, transform_indices = @transform_1, window_bounds = array<i64: 8, 128>}]} {
    %c0 = arith.constant 0 : index
    %c0_0 = arith.constant 0 : index
    %0 = vector.load %arg1[%c0, %c0_0] : memref<8x128xf32, #tpu.memory_space<vmem>>, vector<8x128xf32>
    %cst = arith.constant 1.000000e+00 : f32
    %1 = vector.broadcast %cst : f32 to vector<8x128xf32>
    %2 = arith.addf %0, %1 : vector<8x128xf32>
    %c0_1 = arith.constant 0 : index
    %c0_2 = arith.constant 0 : index
    %3 = vector.load %arg2[%c0_1, %c0_2] : memref<8x128xf32, #tpu.memory_space<vmem>>, vector<8x128xf32>
    tpu.vector_store %arg2[%c0_1, %c0_2], %2 {strides = array<i32>} : memref<8x128xf32, #tpu.memory_space<vmem>>, vector<8x128xf32>,
    return
  }
  func.func @transform_0(%arg0: i32) -> (i32, i32) {
    %c0_i32 = arith.constant 0 : i32
    %c0_i32_0 = arith.constant 0 : i32
    %c0_i32_1 = arith.constant 0 : i32
    return %c0_i32, %c0_i32_0 : i32, i32
  }
  func.func @transform_1(%arg0: i32) -> (i32, i32) {
    %c0_i32 = arith.constant 0 : i32
    %c0_i32_0 = arith.constant 0 : i32
    %c0_i32_1 = arith.constant 0 : i32
    return %c0_i32, %c0_i32_0 : i32, i32
  }
}

module attributes {stable_mosaic.version = 11 : i64} {
  func.func @_resident_mlp_kernel(%arg0: i32, %arg1: memref<8x128xf32, #tpu.memory_space<vmem>>, %arg2: memref<128x128xf32, #tpu.memory_space<vmem>>, %arg3: memref<1x128xf32, #tpu.memory_space<vmem>>, %arg4: memref<2x128x128xf32, #tpu.memory_space<vmem>>, %arg5: memref<2x128xf32, #tpu.memory_space<vmem>>, %arg6: memref<128x128xf32, #tpu.memory_space<vmem>>, %arg7: memref<1x128xf32, #tpu.memory_space<vmem>>, %arg8: memref<8x128xf32, #tpu.memory_space<vmem>>) attributes {dimension_semantics = [#tpu.dimension_semantics<parallel>], iteration_bounds = array<i64: 1>, scalar_prefetch = 0 : i64, scratch_operands = 0 : i64, tpu.core_type = #tpu.core_type<tc>, window_params = [{transform_indices = @transform_0, window_bounds = array<i64: 8, 128>}, {pipeline_mode = #tpu.pipeline_mode<synchronous>, transform_indices = @transform_1, window_bounds = array<i64: 128, 128>}, {pipeline_mode = #tpu.pipeline_mode<synchronous>, transform_indices = @transform_2, window_bounds = array<i64: 1, 128>}, {pipeline_mode = #tpu.pipeline_mode<synchronous>, transform_indices = @transform_3, window_bounds = array<i64: 2, 128, 128>}, {pipeline_mode = #tpu.pipeline_mode<synchronous>, transform_indices = @transform_4, window_bounds = array<i64: 2, 128>}, {pipeline_mode = #tpu.pipeline_mode<synchronous>, transform_indices = @transform_5, window_bounds = array<i64: 128, 128>}, {pipeline_mode = #tpu.pipeline_mode<synchronous>, transform_indices = @transform_6, window_bounds = array<i64: 1, 128>}, {transform_indices = @transform_7, window_bounds = array<i64: 8, 128>}]} {
    %c0 = arith.constant 0 : index
    %c0_0 = arith.constant 0 : index
    %0 = vector.load %arg1[%c0, %c0_0] : memref<8x128xf32, #tpu.memory_space<vmem>>, vector<8x128xf32>
    %c0_1 = arith.constant 0 : index
    %c0_2 = arith.constant 0 : index
    %1 = vector.load %arg2[%c0_1, %c0_2] : memref<128x128xf32, #tpu.memory_space<vmem>>, vector<128x128xf32>
    %cst = arith.constant dense<0.000000e+00> : vector<8x128xf32>
    %2 = tpu.matmul %0, %1, %cst {dimension_numbers = #tpu.dot_dimension_numbers<[1], [0], [0], [1], [0, 0, 1, 1], [], []>} : vector<8x128xf32>, vector<128x128xf32>, vector<8x128xf32> -> vector<8x128xf32>
    %c0_3 = arith.constant 0 : index
    %c0_4 = arith.constant 0 : index
    %3 = vector.load %arg3[%c0_3, %c0_4] : memref<1x128xf32, #tpu.memory_space<vmem>>, vector<1x128xf32>
    %4 = vector.broadcast %3 : vector<1x128xf32> to vector<8x128xf32>
    %5 = arith.addf %2, %4 : vector<8x128xf32>
    %c0_5 = arith.constant 0 : index
    %c0_6 = arith.constant 0 : index
    %c0_7 = arith.constant 0 : index
    %6 = vector.load %arg4[%c0_5, %c0_6, %c0_7] : memref<2x128x128xf32, #tpu.memory_space<vmem>>, vector<1x128x128xf32>
    %7 = vector.shape_cast %6 : vector<1x128x128xf32> to vector<128x128xf32>
    %cst_8 = arith.constant dense<0.000000e+00> : vector<8x128xf32>
    %8 = tpu.matmul %5, %7, %cst_8 {dimension_numbers = #tpu.dot_dimension_numbers<[1], [0], [0], [1], [0, 0, 1, 1], [], []>} : vector<8x128xf32>, vector<128x128xf32>, vector<8x128xf32> -> vector<8x128xf32>
    %c0_9 = arith.constant 0 : index
    %c0_10 = arith.constant 0 : index
    %9 = vector.load %arg5[%c0_9, %c0_10] : memref<2x128xf32, #tpu.memory_space<vmem>>, vector<1x128xf32>
    %10 = vector.broadcast %9 : vector<1x128xf32> to vector<8x128xf32>
    %11 = arith.addf %8, %10 : vector<8x128xf32>
    %cst_11 = arith.constant 0.000000e+00 : f32
    %12 = vector.broadcast %cst_11 : f32 to vector<8x128xf32>
    %13 = arith.maximumf %11, %12 : vector<8x128xf32>
    %c1 = arith.constant 1 : index
    %c0_12 = arith.constant 0 : index
    %c0_13 = arith.constant 0 : index
    %14 = vector.load %arg4[%c1, %c0_12, %c0_13] : memref<2x128x128xf32, #tpu.memory_space<vmem>>, vector<1x128x128xf32>
    %15 = vector.shape_cast %14 : vector<1x128x128xf32> to vector<128x128xf32>
    %cst_14 = arith.constant dense<0.000000e+00> : vector<8x128xf32>
    %16 = tpu.matmul %13, %15, %cst_14 {dimension_numbers = #tpu.dot_dimension_numbers<[1], [0], [0], [1], [0, 0, 1, 1], [], []>} : vector<8x128xf32>, vector<128x128xf32>, vector<8x128xf32> -> vector<8x128xf32>
    %c1_15 = arith.constant 1 : index
    %c0_16 = arith.constant 0 : index
    %17 = vector.load %arg5[%c1_15, %c0_16] : memref<2x128xf32, #tpu.memory_space<vmem>>, vector<1x128xf32>
    %18 = vector.broadcast %17 : vector<1x128xf32> to vector<8x128xf32>
    %19 = arith.addf %16, %18 : vector<8x128xf32>
    %cst_17 = arith.constant 0.000000e+00 : f32
    %20 = vector.broadcast %cst_17 : f32 to vector<8x128xf32>
    %21 = arith.maximumf %19, %20 : vector<8x128xf32>
    %c0_18 = arith.constant 0 : index
    %c0_19 = arith.constant 0 : index
    %22 = vector.load %arg6[%c0_18, %c0_19] : memref<128x128xf32, #tpu.memory_space<vmem>>, vector<128x128xf32>
    %cst_20 = arith.constant dense<0.000000e+00> : vector<8x128xf32>
    %23 = tpu.matmul %21, %22, %cst_20 {dimension_numbers = #tpu.dot_dimension_numbers<[1], [0], [0], [1], [0, 0, 1, 1], [], []>} : vector<8x128xf32>, vector<128x128xf32>, vector<8x128xf32> -> vector<8x128xf32>
    %c0_21 = arith.constant 0 : index
    %c0_22 = arith.constant 0 : index
    %24 = vector.load %arg7[%c0_21, %c0_22] : memref<1x128xf32, #tpu.memory_space<vmem>>, vector<1x128xf32>
    %25 = vector.broadcast %24 : vector<1x128xf32> to vector<8x128xf32>
    %26 = arith.addf %23, %25 : vector<8x128xf32>
    %c0_23 = arith.constant 0 : index
    %c0_24 = arith.constant 0 : index
    %27 = vector.load %arg8[%c0_23, %c0_24] : memref<8x128xf32, #tpu.memory_space<vmem>>, vector<8x128xf32>
    tpu.vector_store %arg8[%c0_23, %c0_24], %26 {strides = array<i32>} : memref<8x128xf32, #tpu.memory_space<vmem>>, vector<8x128xf32>,
    return
  }
  func.func @transform_0(%arg0: i32) -> (i32, i32) {
    %c0_i32 = arith.constant 0 : i32
    %c0_i32_0 = arith.constant 0 : i32
    return %arg0, %c0_i32 : i32, i32
  }
  func.func @transform_1(%arg0: i32) -> (i32, i32) {
    %c0_i32 = arith.constant 0 : i32
    %c0_i32_0 = arith.constant 0 : i32
    %c0_i32_1 = arith.constant 0 : i32
    return %c0_i32, %c0_i32_0 : i32, i32
  }
  func.func @transform_2(%arg0: i32) -> (i32, i32) {
    %c0_i32 = arith.constant 0 : i32
    %c0_i32_0 = arith.constant 0 : i32
    %c0_i32_1 = arith.constant 0 : i32
    return %c0_i32, %c0_i32_0 : i32, i32
  }
  func.func @transform_3(%arg0: i32) -> (i32, i32, i32) {
    %c0_i32 = arith.constant 0 : i32
    %c0_i32_0 = arith.constant 0 : i32
    %c0_i32_1 = arith.constant 0 : i32
    %c0_i32_2 = arith.constant 0 : i32
    return %c0_i32, %c0_i32_0, %c0_i32_1 : i32, i32, i32
  }
  func.func @transform_4(%arg0: i32) -> (i32, i32) {
    %c0_i32 = arith.constant 0 : i32
    %c0_i32_0 = arith.constant 0 : i32
    %c0_i32_1 = arith.constant 0 : i32
    return %c0_i32, %c0_i32_0 : i32, i32
  }
  func.func @transform_5(%arg0: i32) -> (i32, i32) {
    %c0_i32 = arith.constant 0 : i32
    %c0_i32_0 = arith.constant 0 : i32
    %c0_i32_1 = arith.constant 0 : i32
    return %c0_i32, %c0_i32_0 : i32, i32
  }
  func.func @transform_6(%arg0: i32) -> (i32, i32) {
    %c0_i32 = arith.constant 0 : i32
    %c0_i32_0 = arith.constant 0 : i32
    %c0_i32_1 = arith.constant 0 : i32
    return %c0_i32, %c0_i32_0 : i32, i32
  }
  func.func @transform_7(%arg0: i32) -> (i32, i32) {
    %c0_i32 = arith.constant 0 : i32
    %c0_i32_0 = arith.constant 0 : i32
    return %arg0, %c0_i32 : i32, i32
  }
}

</mosaic_0001>

<llo_original>
// kernel: tpu_custom_call.1
$region0: #{tpu_custom_call.1}
  #allocation0 [shape = 'u32[]', space=smem, size = 0x4, offset = 0x4, fixed_abs, tag = 'smem constant byte address 0x4 - core index']
  #allocation1 [shape = 'u32[144,128]{1,0:T(1,128)}', space=vmem, size = 0x12000, scoped, tag = 'internal scratch']
  %s0 = inlined_call_operand.hbm [shape: f32[8,128], index: 0, kind: input, shape index: {}]
  %s1 = inlined_call_operand.hbm [shape: f32[8,128], index: 1, kind: output, shape index: {}]
  %s2 = sld [smem:[#allocation0]]
  $region41: #{tpu_custom_call.1} parent=0
    _
  %s4 = ssub.s32 1, %s2
  %s5 = scalar_select 0, %s4, %s2
  $region1: #{tpu_custom_call.1} parent=0
    #allocation2 [shape = 'u8[4096]{0}', space=vmem, size = 0x1000, scoped, tag = 'input window, operand 0, single buffered']
    #allocation3 [shape = 's32[2]{0}', space=sflag, size = 0x8, scoped, tag = 'scoped memory for tpu_custom_call.1']
    #allocation4 [shape = 's32[2]{0}', space=sflag, size = 0x8, scoped, tag = 'scoped memory for tpu_custom_call.1']
    #allocation5 [shape = 'u8[4096]{0}', space=vmem, size = 0x1000, scoped, tag = 'output window, operand 0, single buffered']
    %6 = vsyncpa [#allocation3], 0
    %7 = vsyncpa [#allocation4], 0
    loop: start=0, step=1, limit=4
    $region2: #{tpu_custom_call.1} parent=1 // loop_pre_header
      _
    $region3: #{tpu_custom_call.1} parent=1 // loop_header
      %s9 = sphi 0, %s13
      %p10 = scmp.ge.s32.totalorder %s9, 4
      %s17 = sphi 0, %s17
      %s19 = sphi 0, %s17
      %s20 = sphi 0, %s19
      %s34 = sphi 0, %s20
      %s38 = sphi 0, %s38
      %s40 = sphi 0, %s38
      %s41 = sphi 0, %s40
      %s55 = sphi 0, %s41
    $region4: #{tpu_custom_call.1} parent=1 // loop_header_branch
      %12 = sbr.rel (%p10) target = $region8
    $region5: #{tpu_custom_call.1} parent=1 // loop_body
      %s14 = ssub.s32 %s9, 1
      %s15 = ssub.s32 %s9, 2
      %s16 = sadd.s32 %s9, 1
      %s18 = sadd.s32 %s17, 1
      %p21 = scmp.eq.s32.totalorder %s9, 1
      %p22 = scmp.ne.s32.totalorder %s17, %s19
      %p23 = scmp.eq.s32.totalorder %s9, 0
      %p24 = por %p22, %p23
      %p25 = scmp.ne.s32.totalorder %s17, %s19
      %p26 = scmp.eq.s32.totalorder %s14, 1
      %p27 = por %p25, %p26
      %p28 = scmp.ne.s32.totalorder %s19, %s20
      %p29 = scmp.eq.s32.totalorder %s14, 0
      %p30 = por %p28, %p29
      %p31 = scmp.ne.s32.totalorder %s19, %s20
      %p32 = scmp.eq.s32.totalorder %s15, 1
      %p33 = por %p31, %p32
      %p35 = scmp.ne.s32.totalorder %s20, %s34
      %p36 = scmp.eq.s32.totalorder %s15, 0
      %p37 = por %p35, %p36
      %s39 = sadd.s32 %s38, 1
      %p42 = scmp.eq.s32.totalorder %s9, 1
      %p43 = scmp.ne.s32.totalorder %s38, %s40
      %p44 = scmp.eq.s32.totalorder %s9, 0
      %p45 = por %p43, %p44
      %p46 = scmp.ne.s32.totalorder %s38, %s40
      %p47 = scmp.eq.s32.totalorder %s14, 1
      %p48 = por %p46, %p47
      %p49 = scmp.ne.s32.totalorder %s40, %s41
      %p50 = scmp.eq.s32.totalorder %s14, 0
      %p51 = por %p49, %p50
      %p52 = scmp.ne.s32.totalorder %s40, %s41
      %p53 = scmp.eq.s32.totalorder %s15, 1
      %p54 = por %p52, %p53
      %p56 = scmp.ne.s32.totalorder %s41, %s55
      %p57 = scmp.eq.s32.totalorder %s15, 0
      %p58 = por %p56, %p57
      %p59 = scmp.le.s32.totalorder 1, %s9
      %p60 = scmp.lt.s32.totalorder %s9, 3
      %p61 = pnand %p59, %p60
      %p62 = pneg %p61
      // Predicated region
      $region9: #{tpu_custom_call.1} parent=5 // pred_check
        _
      $region10: #{tpu_custom_call.1} parent=5 // pred_check_branch
        %64 = sbr.rel (%p61) target = $region12
      $region11: #{tpu_custom_call.1} parent=5 // pred_region
        %s65 = ssub.s32 %s9, 1
        // Predicated region
        $region13: #{tpu_custom_call.1} parent=11 // pred_check
          %p66 = pneg %p30
        $region14: #{tpu_custom_call.1} parent=11 // pred_check_branch
          %68 = sbr.rel (%p66) target = $region16
        $region15: #{tpu_custom_call.1} parent=11 // pred_region
          %s70 = ssub.s32 128, 128
          %71 = vsyncadd [#allocation3], %s70
          %s73 = sshll.u32 [#allocation2], 4
          %s74 = int_to_ptr.vmem [resolvable:$true] %s73
          %76 = dma.hbm_to_vmem [thread:$0]  %s0, 128, %s74, [#allocation3]
        $region16: #{tpu_custom_call.1} parent=11 // pred_fallthru
          _
      $region12: #{tpu_custom_call.1} parent=5 // pred_fallthru
        _
      %p77 = scmp.lt.s32.totalorder %s9, 2
      // Predicated region
      $region17: #{tpu_custom_call.1} parent=5 // pred_check
        %p78 = pneg %p77
      $region18: #{tpu_custom_call.1} parent=5 // pred_check_branch
        %80 = sbr.rel (%p78) target = $region20
      $region19: #{tpu_custom_call.1} parent=5 // pred_region
        _
      $region20: #{tpu_custom_call.1} parent=5 // pred_fallthru
        _
      %p81 = scmp.le.s32.totalorder 1, %s9
      %p82 = scmp.lt.s32.totalorder %s9, 3
      %p83 = pnand %p81, %p82
      %p84 = pneg %p83
      // Predicated region
      $region21: #{tpu_custom_call.1} parent=5 // pred_check
        _
      $region22: #{tpu_custom_call.1} parent=5 // pred_check_branch
        %86 = sbr.rel (%p83) target = $region24
      $region23: #{tpu_custom_call.1} parent=5 // pred_region
        %s87 = ssub.s32 %s9, 1
        // Predicated region
        $region25: #{tpu_custom_call.1} parent=23 // pred_check
          %p88 = pneg %p30
        $region26: #{tpu_custom_call.1} parent=23 // pred_check_branch
          %90 = sbr.rel (%p88) target = $region28
        $region27: #{tpu_custom_call.1} parent=23 // pred_region
          %91 = dma.done [#allocation3], 128
        $region28: #{tpu_custom_call.1} parent=23 // pred_fallthru
          _
        %p92 = pneg %p30
        %p93 = pneg %p27
        %p94 = pneg %p51
        %p95 = pneg %p48
        %v96 = vld [vmem:[#allocation2] sm:$0xff]
        %v97 = vadd.f32 %v96, 1.0
        %98 = vst [vmem:[#allocation5] sm:$0xff] %v97
        // Predicated region
        $region29: #{tpu_custom_call.1} parent=23 // pred_check
          %p99 = pneg %p48
        $region30: #{tpu_custom_call.1} parent=23 // pred_check_branch
          %101 = sbr.rel (%p99) target = $region32
        $region31: #{tpu_custom_call.1} parent=23 // pred_region
          %s103 = ssub.s32 128, 128
          %104 = vsyncadd [#allocation4], %s103
          %s106 = sshll.u32 [#allocation5], 4
          %s107 = int_to_ptr.vmem [resolvable:$true] %s106
          %109 = dma.vmem_to_hbm [thread:$0]  %s107, 128, %s1, [#allocation4]
        $region32: #{tpu_custom_call.1} parent=23 // pred_fallthru
          _
        // Predicated region
        $region33: #{tpu_custom_call.1} parent=23 // pred_check
          %p110 = pneg %p48
        $region34: #{tpu_custom_call.1} parent=23 // pred_check_branch
          %112 = sbr.rel (%p110) target = $region36
        $region35: #{tpu_custom_call.1} parent=23 // pred_region
          %113 = dma.done [#allocation4], 128
        $region36: #{tpu_custom_call.1} parent=23 // pred_fallthru
          _
      $region24: #{tpu_custom_call.1} parent=5 // pred_fallthru
        _
      %p114 = scmp.le.s32.totalorder 2, %s9
      // Predicated region
      $region37: #{tpu_custom_call.1} parent=5 // pred_check
        %p115 = pneg %p114
      $region38: #{tpu_custom_call.1} parent=5 // pred_check_branch
        %117 = sbr.rel (%p115) target = $region40
      $region39: #{tpu_custom_call.1} parent=5 // pred_region
        %s118 = ssub.s32 %s9, 2
      $region40: #{tpu_custom_call.1} parent=5 // pred_fallthru
        _
    $region6: #{tpu_custom_call.1} parent=1 // loop_footer
      %s13 = sadd.s32 1, %s9
    $region7: #{tpu_custom_call.1} parent=1 // loop_footer_branch
      %8 = sbr.rel target = $region3
    $region8: #{tpu_custom_call.1} parent=1 // loop_exit
      _
    %119 = vsyncpa [#allocation3], 1
    %s120 = scalar_lea.sflag [#allocation3], 1
    %121 = vsyncpa %s120, 1
    %122 = vsyncpa [#allocation4], 1
    %s123 = scalar_lea.sflag [#allocation4], 1
    %124 = vsyncpa %s123, 1

// kernel: _forward_jit.1
$region0: #{_forward_jit.1}
  #allocation0 [shape = 'u32[]', space=smem, size = 0x4, offset = 0x4, fixed_abs, tag = 'smem constant byte address 0x4 - core index']
  #allocation1 [shape = 'u32[144,128]{1,0:T(1,128)}', space=vmem, size = 0x12000, scoped, tag = 'internal scratch']
  %s0 = inlined_call_operand.vmem [shape: f32[8,128], index: 0, kind: input, shape index: {}]
  %s1 = inlined_call_operand.hbm [shape: f32[128,128], index: 1, kind: input, shape index: {}]
  %s2 = inlined_call_operand.vmem [shape: f32[1,128], index: 2, kind: input, shape index: {}]
  %s3 = inlined_call_operand.hbm [shape: f32[2,128,128], index: 3, kind: input, shape index: {}]
  %s4 = inlined_call_operand.vmem [shape: f32[2,128], index: 4, kind: input, shape index: {}]
  %s5 = inlined_call_operand.hbm [shape: f32[128,128], index: 5, kind: input, shape index: {}]
  %s6 = inlined_call_operand.vmem [shape: f32[1,128], index: 6, kind: input, shape index: {}]
  %s7 = inlined_call_operand.vmem [shape: f32[8,128], index: 7, kind: output, shape index: {}]
  %s8 = sld [smem:[#allocation0]]
  $region50: #{_forward_jit.1} parent=0
    _
  %s10 = ssub.s32 1, %s8
  %s11 = scalar_select 0, %s10, %s8
  $region1: #{_forward_jit.1} parent=0
    #allocation2 [shape = 'u8[65536]{0}', space=vmem, size = 0x10000, scoped, tag = 'input window, operand 1, single buffered']
    #allocation3 [shape = 's32[1]{0}', space=sflag, size = 0x4, scoped, tag = 'scoped memory for _forward_jit.1']
    #allocation4 [shape = 'u8[131072]{0}', space=vmem, size = 0x20000, scoped, tag = 'input window, operand 3, single buffered']
    #allocation5 [shape = 's32[1]{0}', space=sflag, size = 0x4, scoped, tag = 'scoped memory for _forward_jit.1']
    #allocation6 [shape = 'u8[65536]{0}', space=vmem, size = 0x10000, scoped, tag = 'input window, operand 5, single buffered']
    %12 = vsyncpa [#allocation3], 0
    %13 = vsyncpa [#allocation5], 0
    // Predicated region
    $region2: #{_forward_jit.1} parent=1 // pred_check
      _
    $region3: #{_forward_jit.1} parent=1 // pred_check_branch
      %15 = sbr.rel (0) target = $region5
    $region4: #{_forward_jit.1} parent=1 // pred_region
      _
    $region5: #{_forward_jit.1} parent=1 // pred_fallthru
      _
    // Predicated region
    $region6: #{_forward_jit.1} parent=1 // pred_check
      _
    $region7: #{_forward_jit.1} parent=1 // pred_check_branch
      %17 = sbr.rel (0) target = $region9
    $region8: #{_forward_jit.1} parent=1 // pred_region
      %s19 = ssub.s32 2048, 2048
      %20 = vsyncadd [#allocation3], %s19
      %s21 = sshll.u32 [#allocation2], 4
      %s22 = int_to_ptr.vmem [resolvable:$true] %s21
      %27 = dma.hbm_to_vmem [thread:$0]  %s1, 2048, %s22, [#allocation3], 128, 128, 8
    $region9: #{_forward_jit.1} parent=1 // pred_fallthru
      _
    // Predicated region
    $region10: #{_forward_jit.1} parent=1 // pred_check
      _
    $region11: #{_forward_jit.1} parent=1 // pred_check_branch
      %29 = sbr.rel (0) target = $region13
    $region12: #{_forward_jit.1} parent=1 // pred_region
      _
    $region13: #{_forward_jit.1} parent=1 // pred_fallthru
      _
    // Predicated region
    $region14: #{_forward_jit.1} parent=1 // pred_check
      _
    $region15: #{_forward_jit.1} parent=1 // pred_check_branch
      %31 = sbr.rel (0) target = $region17
    $region16: #{_forward_jit.1} parent=1 // pred_region
      %s33 = ssub.s32 4096, 4096
      %34 = vsyncadd [#allocation5], %s33
      %s35 = sshll.u32 [#allocation4], 4
      %s36 = int_to_ptr.vmem [resolvable:$true] %s35
      %41 = dma.hbm_to_vmem [thread:$0]  %s3, 4096, %s36, [#allocation5], 128, 128, 8
    $region17: #{_forward_jit.1} parent=1 // pred_fallthru
      _
    // Predicated region
    $region18: #{_forward_jit.1} parent=1 // pred_check
      _
    $region19: #{_forward_jit.1} parent=1 // pred_check_branch
      %43 = sbr.rel (0) target = $region21
    $region20: #{_forward_jit.1} parent=1 // pred_region
      _
    $region21: #{_forward_jit.1} parent=1 // pred_fallthru
      _
    // Predicated region
    $region22: #{_forward_jit.1} parent=1 // pred_check
      _
    $region23: #{_forward_jit.1} parent=1 // pred_check_branch
      %45 = sbr.rel (0) target = $region25
    $region24: #{_forward_jit.1} parent=1 // pred_region
      %s47 = ssub.s32 2048, 2048
      %48 = vsyncadd [#allocation5], %s47
      %s49 = sshll.u32 [#allocation6], 4
      %s50 = int_to_ptr.vmem [resolvable:$true] %s49
      %55 = dma.hbm_to_vmem [thread:$0]  %s5, 2048, %s50, [#allocation5], 128, 128, 8
    $region25: #{_forward_jit.1} parent=1 // pred_fallthru
      _
    // Predicated region
    $region26: #{_forward_jit.1} parent=1 // pred_check
      _
    $region27: #{_forward_jit.1} parent=1 // pred_check_branch
      %57 = sbr.rel (0) target = $region29
    $region28: #{_forward_jit.1} parent=1 // pred_region
      _
    $region29: #{_forward_jit.1} parent=1 // pred_fallthru
      _
    // Predicated region
    $region30: #{_forward_jit.1} parent=1 // pred_check
      _
    $region31: #{_forward_jit.1} parent=1 // pred_check_branch
      %59 = sbr.rel (0) target = $region33
    $region32: #{_forward_jit.1} parent=1 // pred_region
      %60 = dma.done [#allocation3], 2048
    $region33: #{_forward_jit.1} parent=1 // pred_fallthru
      _
    // Predicated region
    $region34: #{_forward_jit.1} parent=1 // pred_check
      _
    $region35: #{_forward_jit.1} parent=1 // pred_check_branch
      %62 = sbr.rel (0) target = $region37
    $region36: #{_forward_jit.1} parent=1 // pred_region
      %63 = dma.done [#allocation5], 4096
    $region37: #{_forward_jit.1} parent=1 // pred_fallthru
      _
    // Predicated region
    $region38: #{_forward_jit.1} parent=1 // pred_check
      _
    $region39: #{_forward_jit.1} parent=1 // pred_check_branch
      %65 = sbr.rel (0) target = $region41
    $region40: #{_forward_jit.1} parent=1 // pred_region
      %66 = dma.done [#allocation5], 2048
    $region41: #{_forward_jit.1} parent=1 // pred_fallthru
      _
    %v67 = vld [vmem:[%s0] sm:$0xff]
    %v68 = vld [vmem:[#allocation2] sm:$0xff]
    %v69 = vld [vmem:[#allocation2 + $0x8] sm:$0xff]
    %v70 = vld [vmem:[#allocation2 + $0x10] sm:$0xff]
    %v71 = vld [vmem:[#allocation2 + $0x18] sm:$0xff]
    %v72 = vld [vmem:[#allocation2 + $0x20] sm:$0xff]
    %v73 = vld [vmem:[#allocation2 + $0x28] sm:$0xff]
    %v74 = vld [vmem:[#allocation2 + $0x30] sm:$0xff]
    %v75 = vld [vmem:[#allocation2 + $0x38] sm:$0xff]
    %v76 = vld [vmem:[#allocation2 + $0x40] sm:$0xff]
    %v77 = vld [vmem:[#allocation2 + $0x48] sm:$0xff]
    %v78 = vld [vmem:[#allocation2 + $0x50] sm:$0xff]
    %v79 = vld [vmem:[#allocation2 + $0x58] sm:$0xff]
    %v80 = vld [vmem:[#allocation2 + $0x60] sm:$0xff]
    %v81 = vld [vmem:[#allocation2 + $0x68] sm:$0xff]
    %v82 = vld [vmem:[#allocation2 + $0x70] sm:$0xff]
    %v83 = vld [vmem:[#allocation2 + $0x78] sm:$0xff]
    %v84 = vld [vmem:[%s2] sm:$0x1]
    %v86 = vlaneseq
    %v87 = vshrl.u32 %v86, 7
    %v88 = vsub.s32 0, %v87
    %v89 = vrot.slane %v84, %v88
    %91 = vmatprep.subr.mxu0 0.0
    %92 = vmatpush1.msra.mxu0 %v68
    %93 = vmatprep.subr.mxu0 0.0
    %94 = vmatpush1.msra.mxu0 %v69
    %95 = vmatprep.subr.mxu0 0.0
    %96 = vmatpush1.msra.mxu0 %v70
    %97 = vmatprep.subr.mxu0 0.0
    %98 = vmatpush1.msra.mxu0 %v71
    %99 = vmatprep.subr.mxu0 0.0
    %100 = vmatpush1.msra.mxu0 %v72
    %101 = vmatprep.subr.mxu0 0.0
    %102 = vmatpush1.msra.mxu0 %v73
    %103 = vmatprep.subr.mxu0 0.0
    %104 = vmatpush1.msra.mxu0 %v74
    %105 = vmatprep.subr.mxu0 0.0
    %106 = vmatpush1.msra.mxu0 %v75
    %107 = vmatprep.subr.mxu0 0.0
    %108 = vmatpush1.msra.mxu0 %v76
    %109 = vmatprep.subr.mxu0 0.0
    %110 = vmatpush1.msra.mxu0 %v77
    %111 = vmatprep.subr.mxu0 0.0
    %112 = vmatpush1.msra.mxu0 %v78
    %113 = vmatprep.subr.mxu0 0.0
    %114 = vmatpush1.msra.mxu0 %v79
    %115 = vmatprep.subr.mxu0 0.0
    %116 = vmatpush1.msra.mxu0 %v80
    %117 = vmatprep.subr.mxu0 0.0
    %118 = vmatpush1.msra.mxu0 %v81
    %119 = vmatprep.subr.mxu0 0.0
    %120 = vmatpush1.msra.mxu0 %v82
    %121 = vmatprep.subr.mxu0 0.0
    %122 = vmatpush1.msra.mxu0 %v83
    %123 = vmatprep.subr.mxu0 0.0
    %124 = vmatpush1.msra.mxu0 0.0
    %125 = vmatprep.subr.mxu0 0.0
    %126 = vmatpush1.msra.mxu0 0.0
    %127 = vmatprep.subr.mxu0 0.0
    %128 = vmatpush1.msra.mxu0 0.0
    %129 = vmatprep.subr.mxu0 0.0
    %130 = vmatpush1.msra.mxu0 0.0
    %131 = vmatprep.subr.mxu0 0.0
    %132 = vmatpush1.msra.mxu0 0.0
    %133 = vmatprep.subr.mxu0 0.0
    %134 = vmatpush1.msra.mxu0 0.0
    %135 = vmatprep.subr.mxu0 0.0
    %136 = vmatpush1.msra.mxu0 0.0
    %137 = vmatprep.subr.mxu0 0.0
    %138 = vmatpush1.msra.mxu0 0.0
    %139 = vmatprep.subr.mxu0 0.0
    %140 = vmatpush1.msra.mxu0 0.0
    %141 = vmatprep.subr.mxu0 0.0
    %142 = vmatpush1.msra.mxu0 0.0
    %143 = vmatprep.subr.mxu0 0.0
    %144 = vmatpush1.msra.mxu0 0.0
    %145 = vmatprep.subr.mxu0 0.0
    %146 = vmatpush1.msra.mxu0 0.0
    %147 = vmatprep.subr.mxu0 0.0
    %148 = vmatpush1.msra.mxu0 0.0
    %149 = vmatprep.subr.mxu0 0.0
    %150 = vmatpush1.msra.mxu0 0.0
    %151 = vmatprep.subr.mxu0 0.0
    %152 = vmatpush1.msra.mxu0 0.0
    %153 = vmatprep.subr.mxu0 0.0
    %154 = vmatpush1.msra.mxu0 0.0
    %155 = vmatprep.mubr.f32.mxu0 0.0
    %156 = vmatmul.mubr.f32.gmra.mrb[0].mxu0 %v67
    %v157 = vpop.f32.mrb[0].mxu0
    %v158 = vadd.f32 %v89, %v157
    %v159 = vpop.f32.mrb[0].mxu0
    %160 = vdwg.mxu0
    %v161 = vld [vmem:[#allocation4] sm:$0xff]
    %v162 = vld [vmem:[#allocation4 + $0x8] sm:$0xff]
    %v163 = vld [vmem:[#allocation4 + $0x10] sm:$0xff]
    %v164 = vld [vmem:[#allocation4 + $0x18] sm:$0xff]
    %v165 = vld [vmem:[#allocation4 + $0x20] sm:$0xff]
    %v166 = vld [vmem:[#allocation4 + $0x28] sm:$0xff]
    %v167 = vld [vmem:[#allocation4 + $0x30] sm:$0xff]
    %v168 = vld [vmem:[#allocation4 + $0x38] sm:$0xff]
    %v169 = vld [vmem:[#allocation4 + $0x40] sm:$0xff]
    %v170 = vld [vmem:[#allocation4 + $0x48] sm:$0xff]
    %v171 = vld [vmem:[#allocation4 + $0x50] sm:$0xff]
    %v172 = vld [vmem:[#allocation4 + $0x58] sm:$0xff]
    %v173 = vld [vmem:[#allocation4 + $0x60] sm:$0xff]
    %v174 = vld [vmem:[#allocation4 + $0x68] sm:$0xff]
    %v175 = vld [vmem:[#allocation4 + $0x70] sm:$0xff]
    %v176 = vld [vmem:[#allocation4 + $0x78] sm:$0xff]
    %v177 = vld [vmem:[%s4] sm:$0x1]
    %v178 = vlaneseq
    %v179 = vshrl.u32 %v178, 7
    %v180 = vsub.s32 0, %v179
    %v181 = vrot.slane %v177, %v180
    %182 = vmatprep.subr.mxu0 0.0
    %183 = vmatpush1.msra.mxu0 %v161
    %184 = vmatprep.subr.mxu0 0.0
    %185 = vmatpush1.msra.mxu0 %v162
    %186 = vmatprep.subr.mxu0 0.0
    %187 = vmatpush1.msra.mxu0 %v163
    %188 = vmatprep.subr.mxu0 0.0
    %189 = vmatpush1.msra.mxu0 %v164
    %190 = vmatprep.subr.mxu0 0.0
    %191 = vmatpush1.msra.mxu0 %v165
    %192 = vmatprep.subr.mxu0 0.0
    %193 = vmatpush1.msra.mxu0 %v166
    %194 = vmatprep.subr.mxu0 0.0
    %195 = vmatpush1.msra.mxu0 %v167
    %196 = vmatprep.subr.mxu0 0.0
    %197 = vmatpush1.msra.mxu0 %v168
    %198 = vmatprep.subr.mxu0 0.0
    %199 = vmatpush1.msra.mxu0 %v169
    %200 = vmatprep.subr.mxu0 0.0
    %201 = vmatpush1.msra.mxu0 %v170
    %202 = vmatprep.subr.mxu0 0.0
    %203 = vmatpush1.msra.mxu0 %v171
    %204 = vmatprep.subr.mxu0 0.0
    %205 = vmatpush1.msra.mxu0 %v172
    %206 = vmatprep.subr.mxu0 0.0
    %207 = vmatpush1.msra.mxu0 %v173
    %208 = vmatprep.subr.mxu0 0.0
    %209 = vmatpush1.msra.mxu0 %v174
    %210 = vmatprep.subr.mxu0 0.0
    %211 = vmatpush1.msra.mxu0 %v175
    %212 = vmatprep.subr.mxu0 0.0
    %213 = vmatpush1.msra.mxu0 %v176
    %214 = vmatprep.subr.mxu0 0.0
    %215 = vmatpush1.msra.mxu0 0.0
    %216 = vmatprep.subr.mxu0 0.0
    %217 = vmatpush1.msra.mxu0 0.0
    %218 = vmatprep.subr.mxu0 0.0
    %219 = vmatpush1.msra.mxu0 0.0
    %220 = vmatprep.subr.mxu0 0.0
    %221 = vmatpush1.msra.mxu0 0.0
    %222 = vmatprep.subr.mxu0 0.0
    %223 = vmatpush1.msra.mxu0 0.0
    %224 = vmatprep.subr.mxu0 0.0
    %225 = vmatpush1.msra.mxu0 0.0
    %226 = vmatprep.subr.mxu0 0.0
    %227 = vmatpush1.msra.mxu0 0.0
    %228 = vmatprep.subr.mxu0 0.0
    %229 = vmatpush1.msra.mxu0 0.0
    %230 = vmatprep.subr.mxu0 0.0
    %231 = vmatpush1.msra.mxu0 0.0
    %232 = vmatprep.subr.mxu0 0.0
    %233 = vmatpush1.msra.mxu0 0.0
    %234 = vmatprep.subr.mxu0 0.0
    %235 = vmatpush1.msra.mxu0 0.0
    %236 = vmatprep.subr.mxu0 0.0
    %237 = vmatpush1.msra.mxu0 0.0
    %238 = vmatprep.subr.mxu0 0.0
    %239 = vmatpush1.msra.mxu0 0.0
    %240 = vmatprep.subr.mxu0 0.0
    %241 = vmatpush1.msra.mxu0 0.0
    %242 = vmatprep.subr.mxu0 0.0
    %243 = vmatpush1.msra.mxu0 0.0
    %244 = vmatprep.subr.mxu0 0.0
    %245 = vmatpush1.msra.mxu0 0.0
    %246 = vmatprep.mubr.f32.mxu0 0.0
    %247 = vmatmul.mubr.f32.gmra.mrb[0].mxu0 %v158
    %v248 = vpop.f32.mrb[0].mxu0
    %v249 = vadd.f32 %v181, %v248
    %v250 = vpop.f32.mrb[0].mxu0
    %251 = vdwg.mxu0
    %v252 = vmax.f32 %v249, 0.0
    %s253 = scalar_lea.vmem [#allocation4], 128
    %v254 = vld [vmem:[%s253] sm:$0xff]
    %v255 = vld [vmem:[%s253 + $0x8] sm:$0xff]
    %v256 = vld [vmem:[%s253 + $0x10] sm:$0xff]
    %v257 = vld [vmem:[%s253 + $0x18] sm:$0xff]
    %v258 = vld [vmem:[%s253 + $0x20] sm:$0xff]
    %v259 = vld [vmem:[%s253 + $0x28] sm:$0xff]
    %v260 = vld [vmem:[%s253 + $0x30] sm:$0xff]
    %v261 = vld [vmem:[%s253 + $0x38] sm:$0xff]
    %v262 = vld [vmem:[%s253 + $0x40] sm:$0xff]
    %v263 = vld [vmem:[%s253 + $0x48] sm:$0xff]
    %v264 = vld [vmem:[%s253 + $0x50] sm:$0xff]
    %v265 = vld [vmem:[%s253 + $0x58] sm:$0xff]
    %v266 = vld [vmem:[%s253 + $0x60] sm:$0xff]
    %v267 = vld [vmem:[%s253 + $0x68] sm:$0xff]
    %v268 = vld [vmem:[%s253 + $0x70] sm:$0xff]
    %v269 = vld [vmem:[%s253 + $0x78] sm:$0xff]
    %v270 = vld [vmem:[%s4 + $0x1] sm:$0x1]
    %v271 = vlaneseq
    %v272 = vshrl.u32 %v271, 7
    %v273 = vsub.s32 0, %v272
    %v274 = vrot.slane %v270, %v273
    %275 = vmatprep.subr.mxu0 0.0
    %276 = vmatpush1.msra.mxu0 %v254
    %277 = vmatprep.subr.mxu0 0.0
    %278 = vmatpush1.msra.mxu0 %v255
    %279 = vmatprep.subr.mxu0 0.0
    %280 = vmatpush1.msra.mxu0 %v256
    %281 = vmatprep.subr.mxu0 0.0
    %282 = vmatpush1.msra.mxu0 %v257
    %283 = vmatprep.subr.mxu0 0.0
    %284 = vmatpush1.msra.mxu0 %v258
    %285 = vmatprep.subr.mxu0 0.0
    %286 = vmatpush1.msra.mxu0 %v259
    %287 = vmatprep.subr.mxu0 0.0
    %288 = vmatpush1.msra.mxu0 %v260
    %289 = vmatprep.subr.mxu0 0.0
    %290 = vmatpush1.msra.mxu0 %v261
    %291 = vmatprep.subr.mxu0 0.0
    %292 = vmatpush1.msra.mxu0 %v262
    %293 = vmatprep.subr.mxu0 0.0
    %294 = vmatpush1.msra.mxu0 %v263
    %295 = vmatprep.subr.mxu0 0.0
    %296 = vmatpush1.msra.mxu0 %v264
    %297 = vmatprep.subr.mxu0 0.0
    %298 = vmatpush1.msra.mxu0 %v265
    %299 = vmatprep.subr.mxu0 0.0
    %300 = vmatpush1.msra.mxu0 %v266
    %301 = vmatprep.subr.mxu0 0.0
    %302 = vmatpush1.msra.mxu0 %v267
    %303 = vmatprep.subr.mxu0 0.0
    %304 = vmatpush1.msra.mxu0 %v268
    %305 = vmatprep.subr.mxu0 0.0
    %306 = vmatpush1.msra.mxu0 %v269
    %307 = vmatprep.subr.mxu0 0.0
    %308 = vmatpush1.msra.mxu0 0.0
    %309 = vmatprep.subr.mxu0 0.0
    %310 = vmatpush1.msra.mxu0 0.0
    %311 = vmatprep.subr.mxu0 0.0
    %312 = vmatpush1.msra.mxu0 0.0
    %313 = vmatprep.subr.mxu0 0.0
    %314 = vmatpush1.msra.mxu0 0.0
    %315 = vmatprep.subr.mxu0 0.0
    %316 = vmatpush1.msra.mxu0 0.0
    %317 = vmatprep.subr.mxu0 0.0
    %318 = vmatpush1.msra.mxu0 0.0
    %319 = vmatprep.subr.mxu0 0.0
    %320 = vmatpush1.msra.mxu0 0.0
    %321 = vmatprep.subr.mxu0 0.0
    %322 = vmatpush1.msra.mxu0 0.0
    %323 = vmatprep.subr.mxu0 0.0
    %324 = vmatpush1.msra.mxu0 0.0
    %325 = vmatprep.subr.mxu0 0.0
    %326 = vmatpush1.msra.mxu0 0.0
    %327 = vmatprep.subr.mxu0 0.0
    %328 = vmatpush1.msra.mxu0 0.0
    %329 = vmatprep.subr.mxu0 0.0
    %330 = vmatpush1.msra.mxu0 0.0
    %331 = vmatprep.subr.mxu0 0.0
    %332 = vmatpush1.msra.mxu0 0.0
    %333 = vmatprep.subr.mxu0 0.0
    %334 = vmatpush1.msra.mxu0 0.0
    %335 = vmatprep.subr.mxu0 0.0
    %336 = vmatpush1.msra.mxu0 0.0
    %337 = vmatprep.subr.mxu0 0.0
    %338 = vmatpush1.msra.mxu0 0.0
    %339 = vmatprep.mubr.f32.mxu0 0.0
    %340 = vmatmul.mubr.f32.gmra.mrb[0].mxu0 %v252
    %v341 = vpop.f32.mrb[0].mxu0
    %v342 = vadd.f32 %v274, %v341
    %v343 = vpop.f32.mrb[0].mxu0
    %344 = vdwg.mxu0
    %v345 = vmax.f32 %v342, 0.0
    %v346 = vld [vmem:[#allocation6] sm:$0xff]
    %v347 = vld [vmem:[#allocation6 + $0x8] sm:$0xff]
    %v348 = vld [vmem:[#allocation6 + $0x10] sm:$0xff]
    %v349 = vld [vmem:[#allocation6 + $0x18] sm:$0xff]
    %v350 = vld [vmem:[#allocation6 + $0x20] sm:$0xff]
    %v351 = vld [vmem:[#allocation6 + $0x28] sm:$0xff]
    %v352 = vld [vmem:[#allocation6 + $0x30] sm:$0xff]
    %v353 = vld [vmem:[#allocation6 + $0x38] sm:$0xff]
    %v354 = vld [vmem:[#allocation6 + $0x40] sm:$0xff]
    %v355 = vld [vmem:[#allocation6 + $0x48] sm:$0xff]
    %v356 = vld [vmem:[#allocation6 + $0x50] sm:$0xff]
    %v357 = vld [vmem:[#allocation6 + $0x58] sm:$0xff]
    %v358 = vld [vmem:[#allocation6 + $0x60] sm:$0xff]
    %v359 = vld [vmem:[#allocation6 + $0x68] sm:$0xff]
    %v360 = vld [vmem:[#allocation6 + $0x70] sm:$0xff]
    %v361 = vld [vmem:[#allocation6 + $0x78] sm:$0xff]
    %v362 = vld [vmem:[%s6] sm:$0x1]
    %v364 = vlaneseq
    %v365 = vshrl.u32 %v364, 7
    %v366 = vsub.s32 0, %v365
    %v367 = vrot.slane %v362, %v366
    %369 = vmatprep.subr.mxu0 0.0
    %370 = vmatpush1.msra.mxu0 %v346
    %371 = vmatprep.subr.mxu0 0.0
    %372 = vmatpush1.msra.mxu0 %v347
    %373 = vmatprep.subr.mxu0 0.0
    %374 = vmatpush1.msra.mxu0 %v348
    %375 = vmatprep.subr.mxu0 0.0
    %376 = vmatpush1.msra.mxu0 %v349
    %377 = vmatprep.subr.mxu0 0.0
    %378 = vmatpush1.msra.mxu0 %v350
    %379 = vmatprep.subr.mxu0 0.0
    %380 = vmatpush1.msra.mxu0 %v351
    %381 = vmatprep.subr.mxu0 0.0
    %382 = vmatpush1.msra.mxu0 %v352
    %383 = vmatprep.subr.mxu0 0.0
    %384 = vmatpush1.msra.mxu0 %v353
    %385 = vmatprep.subr.mxu0 0.0
    %386 = vmatpush1.msra.mxu0 %v354
    %387 = vmatprep.subr.mxu0 0.0
    %388 = vmatpush1.msra.mxu0 %v355
    %389 = vmatprep.subr.mxu0 0.0
    %390 = vmatpush1.msra.mxu0 %v356
    %391 = vmatprep.subr.mxu0 0.0
    %392 = vmatpush1.msra.mxu0 %v357
    %393 = vmatprep.subr.mxu0 0.0
    %394 = vmatpush1.msra.mxu0 %v358
    %395 = vmatprep.subr.mxu0 0.0
    %396 = vmatpush1.msra.mxu0 %v359
    %397 = vmatprep.subr.mxu0 0.0
    %398 = vmatpush1.msra.mxu0 %v360
    %399 = vmatprep.subr.mxu0 0.0
    %400 = vmatpush1.msra.mxu0 %v361
    %401 = vmatprep.subr.mxu0 0.0
    %402 = vmatpush1.msra.mxu0 0.0
    %403 = vmatprep.subr.mxu0 0.0
    %404 = vmatpush1.msra.mxu0 0.0
    %405 = vmatprep.subr.mxu0 0.0
    %406 = vmatpush1.msra.mxu0 0.0
    %407 = vmatprep.subr.mxu0 0.0
    %408 = vmatpush1.msra.mxu0 0.0
    %409 = vmatprep.subr.mxu0 0.0
    %410 = vmatpush1.msra.mxu0 0.0
    %411 = vmatprep.subr.mxu0 0.0
    %412 = vmatpush1.msra.mxu0 0.0
    %413 = vmatprep.subr.mxu0 0.0
    %414 = vmatpush1.msra.mxu0 0.0
    %415 = vmatprep.subr.mxu0 0.0
    %416 = vmatpush1.msra.mxu0 0.0
    %417 = vmatprep.subr.mxu0 0.0
    %418 = vmatpush1.msra.mxu0 0.0
    %419 = vmatprep.subr.mxu0 0.0
    %420 = vmatpush1.msra.mxu0 0.0
    %421 = vmatprep.subr.mxu0 0.0
    %422 = vmatpush1.msra.mxu0 0.0
    %423 = vmatprep.subr.mxu0 0.0
    %424 = vmatpush1.msra.mxu0 0.0
    %425 = vmatprep.subr.mxu0 0.0
    %426 = vmatpush1.msra.mxu0 0.0
    %427 = vmatprep.subr.mxu0 0.0
    %428 = vmatpush1.msra.mxu0 0.0
    %429 = vmatprep.subr.mxu0 0.0
    %430 = vmatpush1.msra.mxu0 0.0
    %431 = vmatprep.subr.mxu0 0.0
    %432 = vmatpush1.msra.mxu0 0.0
    %433 = vmatprep.mubr.f32.mxu0 0.0
    %434 = vmatmul.mubr.f32.gmra.mrb[0].mxu0 %v345
    %v435 = vpop.f32.mrb[0].mxu0
    %v436 = vadd.f32 %v367, %v435
    %v437 = vpop.f32.mrb[0].mxu0
    %438 = vdwg.mxu0
    %439 = vst [vmem:[%s7] sm:$0xff] %v436
    // Predicated region
    $region42: #{_forward_jit.1} parent=1 // pred_check
      _
    $region43: #{_forward_jit.1} parent=1 // pred_check_branch
      %441 = sbr.rel (0) target = $region45
    $region44: #{_forward_jit.1} parent=1 // pred_region
      _
    $region45: #{_forward_jit.1} parent=1 // pred_fallthru
      _
    // Predicated region
    $region46: #{_forward_jit.1} parent=1 // pred_check
      _
    $region47: #{_forward_jit.1} parent=1 // pred_check_branch
      %443 = sbr.rel (0) target = $region49
    $region48: #{_forward_jit.1} parent=1 // pred_region
      _
    $region49: #{_forward_jit.1} parent=1 // pred_fallthru
      _
    %444 = vsyncpa [#allocation3], 1
    %445 = vsyncpa [#allocation5], 1

</llo_original>
